<compile_context>
chip_gen: v5e
topology: v5e:2x2
jax: 0.10.0
libtpu: 0.0.40
codegen_flags: <defaults>
</compile_context>

<pallas_src>
import functools

import jax
import jax.numpy as jnp
import numpy as np
from jax.experimental import pallas as pl
from jax.experimental.pallas import tpu as pltpu

_BETA = 0.0                  # PULoss.beta
_LANES = 128
_DEFAULT_TILE_ROWS = 2048    # 2048*128*4 B = 1 MiB per f32 input tile
_DEFAULT_NUM_SHARDS = 2      # v7x has 2 TCs; <=1 duplicated (masked) tile elsewhere
# Route the sigmoid's divide through the EUP approximate reciprocal (frees the
# VALU slot on v7x).  Left False so results stay bit-faithful to f32 sigmoid.
_APPROX_RECIPROCAL = False


def _make_pu_loss_kernel(n_valid, tile_rows):
    """Build the per-tile kernel, closed over static n_valid / tile_rows."""

    def kernel(x_ref, lab_ref, out_ref):
        # x_ref, lab_ref : (tile_rows, 128) f32   (logits, +1/-1 labels)
        # out_ref        : (1, 4, 8, 128) f32     per-shard resident accumulator:
        #                  [sum(pos), sum(unl), sum(pos*py), sum(unl*py)]
        s = pl.program_id(0)             # shard (parallel axis)
        j = pl.program_id(1)             # tile within shard (reduction axis)
        nj = pl.num_programs(1)

        @pl.when(j == 0)
        def _init():
            out_ref[...] = jnp.zeros(out_ref.shape, out_ref.dtype)

        x = x_ref[...]
        lab = lab_ref[...]

        # Validity mask for ragged tails / duplicated shard tiles.  `flat` is a
        # compile-time constant pattern; only the scalar `limit` changes per
        # tile (computed from the *unclamped* tile id, so over-coverage tiles
        # mask to zero even though their DMA re-reads a clamped valid tile).
        t = s * nj + j
        row = jax.lax.broadcasted_iota(jnp.int32, (tile_rows, _LANES), 0)
        col = jax.lax.broadcasted_iota(jnp.int32, (tile_rows, _LANES), 1)
        flat = row * _LANES + col                       # constant-folded
        limit = n_valid - t * (tile_rows * _LANES)      # scalar per tile
        valid = flat < limit

        if _APPROX_RECIPROCAL:
            py = pl.reciprocal(1.0 + jnp.exp(x), approx=True)   # sigmoid(-x)
        else:
            py = jax.nn.sigmoid(-x)                             # sigmoid(-x)

        pos_sel = valid & (lab == 1.0)
        unl_sel = valid & (lab == -1.0)

        pos_cnt = pos_sel.astype(jnp.float32)
        unl_cnt = unl_sel.astype(jnp.float32)
        pos_py = jnp.where(pos_sel, py, 0.0)   # where => garbage x never leaks
        unl_py = jnp.where(unl_sel, py, 0.0)

        # Fold the (tile_rows, 128) tile into an (8, 128) vreg with pure VPU
        # adds (the reshape matches the native sublane tiling); the cross-lane
        # reduction happens once, in the wrapper.
        def fold(v):
            return jnp.sum(v.reshape(tile_rows // 8, 8, _LANES), axis=0)

        out_ref[0, 0] += fold(pos_cnt)
        out_ref[0, 1] += fold(unl_cnt)
        out_ref[0, 2] += fold(pos_py)
        out_ref[0, 3] += fold(unl_py)

    return kernel


@functools.partial(jax.jit, static_argnums=(3, 4))
def _pu_loss_forward(x, label, prior, tile_rows, num_shards):
    x_flat = jnp.reshape(x, (-1,))
    if x_flat.dtype != jnp.float32:
        x_flat = x_flat.astype(jnp.float32)
    lab_flat = jnp.reshape(label, (-1,))
    if lab_flat.dtype != jnp.float32:
        lab_flat = lab_flat.astype(jnp.float32)

    n = x_flat.shape[0]
    rows = -(-n // _LANES)
    rows = max(rows, 8)                  # need at least one (8, 128) f32 tile
    padded = rows * _LANES
    if padded != n:
        # Only hit when N % 128 != 0 or N < 1024; the common aligned case is a
        # pure (zero-copy) reshape.  Tail correctness comes from the in-kernel
        # index mask, so the pad value is irrelevant.
        x_flat = jnp.pad(x_flat, (0, padded - n))
        lab_flat = jnp.pad(lab_flat, (0, padded - n))
    x2 = x_flat.reshape(rows, _LANES)
    lab2 = lab_flat.reshape(rows, _LANES)

    tr = max(8, (min(int(tile_rows), rows) // 8) * 8)
    total_tiles = -(-rows // tr)
    shards = max(1, min(int(num_shards), total_tiles))
    tiles_per_shard = -(-total_tiles // shards)

    def tile_map(s, j):
        # Clamp the DMA to a valid tile; the kernel masks duplicated coverage
        # via the unclamped tile id.
        t = s * tiles_per_shard + j
        return (jnp.minimum(t, total_tiles - 1), 0)

    partials = pl.pallas_call(
        _make_pu_loss_kernel(n, tr),
        out_shape=jax.ShapeDtypeStruct((shards, 4, 8, _LANES), jnp.float32),
        grid=(shards, tiles_per_shard),
        in_specs=[
            pl.BlockSpec((tr, _LANES), tile_map),   # logits  (f32, VMEM)
            pl.BlockSpec((tr, _LANES), tile_map),   # labels  (native f32, VMEM)
        ],
        out_specs=pl.BlockSpec((1, 4, 8, _LANES), lambda s, j: (s, 0, 0, 0)),
        compiler_params=pltpu.CompilerParams(
            dimension_semantics=("parallel", "arbitrary"),
            vmem_limit_bytes=32 * 1024 * 1024,
        ),
    )(x2, lab2)

    # Tiny scalar epilogue (cross-shard + cross-lane reduction, divides, beta
    # branch) in plain JAX -- negligible next to the streaming reduction and
    # required for the multi-TensorCore grid.
    sums = jnp.sum(partials, axis=(0, 2, 3))        # (4,)
    s_pos, s_unl = sums[0], sums[1]
    s_pos_py, s_unl_py = sums[2], sums[3]
    prior = prior.astype(jnp.float32)
    pos_num = jnp.maximum(s_pos, 1.0)
    unl_num = jnp.maximum(s_unl, 1.0)
    positive_loss = prior * s_pos_py / pos_num
    # sum((unl/un - prior*pos/pn) * (1 - py)), with uy = 1 - py algebraically.
    negative_loss = (s_unl - s_unl_py) / unl_num - prior * (s_pos - s_pos_py) / pos_num
    return jnp.where(negative_loss < -_BETA,
                     positive_loss - _BETA,
                     positive_loss + negative_loss)


def pu_loss_forward(x, label, prior,
                    tile_rows=_DEFAULT_TILE_ROWS, num_shards=_DEFAULT_NUM_SHARDS):
    """x: (N, 1) or (N,) float logits; label: (N,) with +1/-1; prior: scalar.

    Returns the scalar PU-loss objective (float32), matching PULoss.forward.
    """
    return _pu_loss_forward(jnp.asarray(x), jnp.asarray(label),
                            jnp.asarray(prior, jnp.float32),
                            int(tile_rows), int(num_shards))


def _pu_loss_ref(x, label, prior):
    """Pure-NumPy (float64) reference reproducing PULoss.forward."""
    x = np.asarray(x, np.float64).squeeze()
    label = np.asarray(label, np.float64)
    prior = float(prior)
    pos = (label == 1).astype(np.float64)
    unl = (label == -1).astype(np.float64)
    pn = max(float(pos.sum()), 1.0)
    un = max(float(unl.sum()), 1.0)
    py = 1.0 / (1.0 + np.exp(x))      # sigmoid(-x)
    uy = 1.0 / (1.0 + np.exp(-x))     # sigmoid(x)
    p_loss = float(np.sum(prior * pos / pn * py))
    n_loss = float(np.sum((unl / un - prior * pos / pn) * uy))
    if n_loss < -_BETA:
        return p_loss - _BETA
    return p_loss + n_loss


if __name__ == "__main__":
    key = jax.random.PRNGKey(0)
    prior = 0.3

    # (N, tile_rows): small demo shapes covering the interesting paths:
    #   128   -> tiny input padded to one (8,128) tile, shard count clamps to 1
    #   6000  -> N % 128 != 0 (ragged tail mask) + multi-tile, both shards
    #   20480 -> N % 128 == 0 zero-copy path, multi-tile, both shards + clamp
    for n, tile_rows in ((128, _DEFAULT_TILE_ROWS), (6000, 16), (20480, 64)):
        k1, k2 = jax.random.split(jax.random.fold_in(key, n))
        x = jax.random.normal(k1, (n, 1), dtype=jnp.float32)
        label = jnp.where(jax.random.uniform(k2, (n,)) < 0.3, 1.0, -1.0)
        label = label.astype(jnp.float32)

        out = pu_loss_forward(x, label, prior, tile_rows=tile_rows)
        out = jax.block_until_ready(out)

        ref = _pu_loss_ref(np.asarray(x), np.asarray(label), prior)
        assert np.isclose(float(out), ref, rtol=1e-4, atol=1e-5), \
            (n, float(out), ref)

    print("KERNEL_OK")
</pallas_src>

<mosaic_0001>
module attributes {stable_mosaic.version = 11 : i64} {
  func.func @kernel(%arg0: i32, %arg1: i32, %arg2: memref<8x128xf32, #tpu.memory_space<vmem>>, %arg3: memref<8x128xf32, #tpu.memory_space<vmem>>, %arg4: memref<1x4x8x128xf32, #tpu.memory_space<vmem>>) attributes {dimension_semantics = [#tpu.dimension_semantics<parallel>, #tpu.dimension_semantics<arbitrary>], iteration_bounds = array<i64: 1, 1>, scalar_prefetch = 0 : i64, scratch_operands = 0 : i64, tpu.core_type = #tpu.core_type<tc>, window_params = [{transform_indices = @transform_0, window_bounds = array<i64: 8, 128>}, {transform_indices = @transform_1, window_bounds = array<i64: 8, 128>}, {transform_indices = @transform_2, window_bounds = array<i64: 1, 4, 8, 128>}]} {
    %c0_i32 = arith.constant 0 : i32
    %0 = arith.cmpi eq, %arg1, %c0_i32 : i32
    %1 = arith.extui %0 : i1 to i32
    %c0_i32_0 = arith.constant 0 : i32
    %2 = arith.cmpi ne, %1, %c0_i32_0 : i32
    scf.if %2 {
      %cst_43 = arith.constant 0.000000e+00 : f32
      %69 = vector.broadcast %cst_43 : f32 to vector<1x4x8x128xf32>
      %c0_44 = arith.constant 0 : index
      %c0_45 = arith.constant 0 : index
      %c0_46 = arith.constant 0 : index
      %c0_47 = arith.constant 0 : index
      %70 = vector.load %arg4[%c0_44, %c0_45, %c0_46, %c0_47] : memref<1x4x8x128xf32, #tpu.memory_space<vmem>>, vector<1x4x8x128xf32>
      tpu.vector_store %arg4[%c0_44, %c0_45, %c0_46, %c0_47], %69 {strides = array<i32>} : memref<1x4x8x128xf32, #tpu.memory_space<vmem>>, vector<1x4x8x128xf32>,
    } else {
    }
    %c0 = arith.constant 0 : index
    %c0_1 = arith.constant 0 : index
    %3 = vector.load %arg2[%c0, %c0_1] : memref<8x128xf32, #tpu.memory_space<vmem>>, vector<8x128xf32>
    %c0_2 = arith.constant 0 : index
    %c0_3 = arith.constant 0 : index
    %4 = vector.load %arg3[%c0_2, %c0_3] : memref<8x128xf32, #tpu.memory_space<vmem>>, vector<8x128xf32>
    %c1_i32 = arith.constant 1 : i32
    %5 = arith.muli %arg0, %c1_i32 : i32
    %6 = arith.addi %5, %arg1 : i32
    %7 = tpu.iota {dimensions = array<i32: 0>} : vector<8x128xi32>
    %8 = tpu.iota {dimensions = array<i32: 1>} : vector<8x128xi32>
    %c128_i32 = arith.constant 128 : i32
    %9 = vector.broadcast %c128_i32 : i32 to vector<8x128xi32>
    %10 = arith.muli %7, %9 : vector<8x128xi32>
    %11 = arith.addi %10, %8 : vector<8x128xi32>
    %c1024_i32 = arith.constant 1024 : i32
    %12 = arith.muli %6, %c1024_i32 : i32
    %c128_i32_4 = arith.constant 128 : i32
    %13 = arith.subi %c128_i32_4, %12 : i32
    %14 = vector.broadcast %13 : i32 to vector<8x128xi32>
    %15 = arith.cmpi slt, %11, %14 : vector<8x128xi32>
    %cst = arith.constant 0.000000e+00 : f32
    %16 = vector.broadcast %cst : f32 to vector<8x128xf32>
    %17 = arith.subf %16, %3 : vector<8x128xf32>
    %18 = arith.negf %17 : vector<8x128xf32>
    %19 = math.exp %18 : vector<8x128xf32>
    %cst_5 = arith.constant 1.000000e+00 : f32
    %20 = vector.broadcast %cst_5 : f32 to vector<8x128xf32>
    %21 = arith.addf %20, %19 : vector<8x128xf32>
    %22 = arith.divf %20, %21 : vector<8x128xf32>
    %cst_6 = arith.constant 1.000000e+00 : f32
    %23 = vector.broadcast %cst_6 : f32 to vector<8x128xf32>
    %24 = arith.cmpf oeq, %4, %23 : vector<8x128xf32>
    %25 = arith.andi %15, %24 : vector<8x128xi1>
    %cst_7 = arith.constant -1.000000e+00 : f32
    %26 = vector.broadcast %cst_7 : f32 to vector<8x128xf32>
    %27 = arith.cmpf oeq, %4, %26 : vector<8x128xf32>
    %28 = arith.andi %15, %27 : vector<8x128xi1>
    %29 = arith.extui %25 : vector<8x128xi1> to vector<8x128xi32>
    %30 = arith.sitofp %29 : vector<8x128xi32> to vector<8x128xf32>
    %31 = arith.extui %28 : vector<8x128xi1> to vector<8x128xi32>
    %32 = arith.sitofp %31 : vector<8x128xi32> to vector<8x128xf32>
    %cst_8 = arith.constant 0.000000e+00 : f32
    %33 = vector.broadcast %cst_8 : f32 to vector<8x128xf32>
    %34 = arith.select %25, %22, %33 : vector<8x128xi1>, vector<8x128xf32>
    %cst_9 = arith.constant 0.000000e+00 : f32
    %35 = vector.broadcast %cst_9 : f32 to vector<8x128xf32>
    %36 = arith.select %28, %22, %35 : vector<8x128xi1>, vector<8x128xf32>
    %c0_10 = arith.constant 0 : index
    %c0_11 = arith.constant 0 : index
    %c0_12 = arith.constant 0 : index
    %c0_13 = arith.constant 0 : index
    %37 = vector.load %arg4[%c0_10, %c0_11, %c0_12, %c0_13] : memref<1x4x8x128xf32, #tpu.memory_space<vmem>>, vector<1x1x8x128xf32>
    %38 = vector.shape_cast %37 : vector<1x1x8x128xf32> to vector<8x128xf32>
    %39 = vector.shape_cast %30 : vector<8x128xf32> to vector<1x8x128xf32>
    %cst_14 = arith.constant dense<0.000000e+00> : vector<8x128xf32>
    %40 = vector.multi_reduction <add>, %39, %cst_14 [0] : vector<1x8x128xf32> to vector<8x128xf32>
    %41 = arith.addf %38, %40 : vector<8x128xf32>
    %c0_15 = arith.constant 0 : index
    %c0_16 = arith.constant 0 : index
    %c0_17 = arith.constant 0 : index
    %c0_18 = arith.constant 0 : index
    %42 = vector.load %arg4[%c0_15, %c0_16, %c0_17, %c0_18] : memref<1x4x8x128xf32, #tpu.memory_space<vmem>>, vector<1x1x8x128xf32>
    %43 = vector.shape_cast %42 : vector<1x1x8x128xf32> to vector<8x128xf32>
    %44 = vector.shape_cast %41 : vector<8x128xf32> to vector<1x1x8x128xf32>
    tpu.vector_store %arg4[%c0_15, %c0_16, %c0_17, %c0_18], %44 {strides = array<i32>} : memref<1x4x8x128xf32, #tpu.memory_space<vmem>>, vector<1x1x8x128xf32>,
    %c0_19 = arith.constant 0 : index
    %c1 = arith.constant 1 : index
    %c0_20 = arith.constant 0 : index
    %c0_21 = arith.constant 0 : index
    %45 = vector.load %arg4[%c0_19, %c1, %c0_20, %c0_21] : memref<1x4x8x128xf32, #tpu.memory_space<vmem>>, vector<1x1x8x128xf32>
    %46 = vector.shape_cast %45 : vector<1x1x8x128xf32> to vector<8x128xf32>
    %47 = vector.shape_cast %32 : vector<8x128xf32> to vector<1x8x128xf32>
    %cst_22 = arith.constant dense<0.000000e+00> : vector<8x128xf32>
    %48 = vector.multi_reduction <add>, %47, %cst_22 [0] : vector<1x8x128xf32> to vector<8x128xf32>
    %49 = arith.addf %46, %48 : vector<8x128xf32>
    %c0_23 = arith.constant 0 : index
    %c1_24 = arith.constant 1 : index
    %c0_25 = arith.constant 0 : index
    %c0_26 = arith.constant 0 : index
    %50 = vector.load %arg4[%c0_23, %c1_24, %c0_25, %c0_26] : memref<1x4x8x128xf32, #tpu.memory_space<vmem>>, vector<1x1x8x128xf32>
    %51 = vector.shape_cast %50 : vector<1x1x8x128xf32> to vector<8x128xf32>
    %52 = vector.shape_cast %49 : vector<8x128xf32> to vector<1x1x8x128xf32>
    tpu.vector_store %arg4[%c0_23, %c1_24, %c0_25, %c0_26], %52 {strides = array<i32>} : memref<1x4x8x128xf32, #tpu.memory_space<vmem>>, vector<1x1x8x128xf32>,
    %c0_27 = arith.constant 0 : index
    %c2 = arith.constant 2 : index
    %c0_28 = arith.constant 0 : index
    %c0_29 = arith.constant 0 : index
    %53 = vector.load %arg4[%c0_27, %c2, %c0_28, %c0_29] : memref<1x4x8x128xf32, #tpu.memory_space<vmem>>, vector<1x1x8x128xf32>
    %54 = vector.shape_cast %53 : vector<1x1x8x128xf32> to vector<8x128xf32>
    %55 = vector.shape_cast %34 : vector<8x128xf32> to vector<1x8x128xf32>
    %cst_30 = arith.constant dense<0.000000e+00> : vector<8x128xf32>
    %56 = vector.multi_reduction <add>, %55, %cst_30 [0] : vector<1x8x128xf32> to vector<8x128xf32>
    %57 = arith.addf %54, %56 : vector<8x128xf32>
    %c0_31 = arith.constant 0 : index
    %c2_32 = arith.constant 2 : index
    %c0_33 = arith.constant 0 : index
    %c0_34 = arith.constant 0 : index
    %58 = vector.load %arg4[%c0_31, %c2_32, %c0_33, %c0_34] : memref<1x4x8x128xf32, #tpu.memory_space<vmem>>, vector<1x1x8x128xf32>
    %59 = vector.shape_cast %58 : vector<1x1x8x128xf32> to vector<8x128xf32>
    %60 = vector.shape_cast %57 : vector<8x128xf32> to vector<1x1x8x128xf32>
    tpu.vector_store %arg4[%c0_31, %c2_32, %c0_33, %c0_34], %60 {strides = array<i32>} : memref<1x4x8x128xf32, #tpu.memory_space<vmem>>, vector<1x1x8x128xf32>,
    %c0_35 = arith.constant 0 : index
    %c3 = arith.constant 3 : index
    %c0_36 = arith.constant 0 : index
    %c0_37 = arith.constant 0 : index
    %61 = vector.load %arg4[%c0_35, %c3, %c0_36, %c0_37] : memref<1x4x8x128xf32, #tpu.memory_space<vmem>>, vector<1x1x8x128xf32>
    %62 = vector.shape_cast %61 : vector<1x1x8x128xf32> to vector<8x128xf32>
    %63 = vector.shape_cast %36 : vector<8x128xf32> to vector<1x8x128xf32>
    %cst_38 = arith.constant dense<0.000000e+00> : vector<8x128xf32>
    %64 = vector.multi_reduction <add>, %63, %cst_38 [0] : vector<1x8x128xf32> to vector<8x128xf32>
    %65 = arith.addf %62, %64 : vector<8x128xf32>
    %c0_39 = arith.constant 0 : index
    %c3_40 = arith.constant 3 : index
    %c0_41 = arith.constant 0 : index
    %c0_42 = arith.constant 0 : index
    %66 = vector.load %arg4[%c0_39, %c3_40, %c0_41, %c0_42] : memref<1x4x8x128xf32, #tpu.memory_space<vmem>>, vector<1x1x8x128xf32>
    %67 = vector.shape_cast %66 : vector<1x1x8x128xf32> to vector<8x128xf32>
    %68 = vector.shape_cast %65 : vector<8x128xf32> to vector<1x1x8x128xf32>
    tpu.vector_store %arg4[%c0_39, %c3_40, %c0_41, %c0_42], %68 {strides = array<i32>} : memref<1x4x8x128xf32, #tpu.memory_space<vmem>>, vector<1x1x8x128xf32>,
    return
  }
  func.func @transform_0(%arg0: i32, %arg1: i32) -> (i32, i32) {
    %c1_i32 = arith.constant 1 : i32
    %0 = arith.muli %arg0, %c1_i32 : i32
    %1 = arith.addi %0, %arg1 : i32
    %c0_i32 = arith.constant 0 : i32
    %2 = arith.minsi %1, %c0_i32 : i32
    %c0_i32_0 = arith.constant 0 : i32
    %c0_i32_1 = arith.constant 0 : i32
    return %2, %c0_i32_0 : i32, i32
  }
  func.func @transform_1(%arg0: i32, %arg1: i32) -> (i32, i32) {
    %c1_i32 = arith.constant 1 : i32
    %0 = arith.muli %arg0, %c1_i32 : i32
    %1 = arith.addi %0, %arg1 : i32
    %c0_i32 = arith.constant 0 : i32
    %2 = arith.minsi %1, %c0_i32 : i32
    %c0_i32_0 = arith.constant 0 : i32
    %c0_i32_1 = arith.constant 0 : i32
    return %2, %c0_i32_0 : i32, i32
  }
  func.func @transform_2(%arg0: i32, %arg1: i32) -> (i32, i32, i32, i32) {
    %c0_i32 = arith.constant 0 : i32
    %c0_i32_0 = arith.constant 0 : i32
    %c0_i32_1 = arith.constant 0 : i32
    %c0_i32_2 = arith.constant 0 : i32
    return %arg0, %c0_i32, %c0_i32_0, %c0_i32_1 : i32, i32, i32, i32
  }
}

</mosaic_0001>

<llo_original>
// kernel: _pu_loss_forward.1
$region0: #{_pu_loss_forward.1}
  #allocation0 [shape = 'u32[]', space=smem, size = 0x4, offset = 0x4, fixed_abs, tag = 'smem constant byte address 0x4 - core index']
  #allocation1 [shape = 'u32[72,128]{1,0:T(1,128)}', space=vmem, size = 0x9000, scoped, tag = 'internal scratch']
  %s0 = inlined_call_operand.vmem [shape: f32[8,128], index: 0, kind: input, shape index: {}]
  %s1 = inlined_call_operand.vmem [shape: f32[8,128], index: 1, kind: input, shape index: {}]
  %s2 = inlined_call_operand.vmem [shape: f32[1,4,8,128], index: 2, kind: output, shape index: {}]
  %s3 = sld [smem:[#allocation0]]
  $region22: #{_pu_loss_forward.1} parent=0
    _
  %s5 = ssub.s32 1, %s3
  %s6 = scalar_select 0, %s5, %s3
  // Predicated region
  $region2: #{_pu_loss_forward.1} parent=0 // pred_check
    _
  $region3: #{_pu_loss_forward.1} parent=0 // pred_check_branch
    %8 = sbr.rel (0) target = $region5
  $region4: #{_pu_loss_forward.1} parent=0 // pred_region
    %s9 = sadd.s32 0, 0
    %p10 = scmp.lt.s32.totalorder %s9, 0
    %s11 = scalar_select %p10, %s9, 0
    %p12 = scmp.lt.s32.totalorder %s11, 0
    %s13 = scalar_select %p12, %s11, 0
    %s14 = smul.addr %s13, 8
    %s15 = scalar_lea.vmem %s0, %s14
    %s16 = sadd.s32 0, 0
    %p17 = scmp.lt.s32.totalorder %s16, 0
    %s18 = scalar_select %p17, %s16, 0
  $region5: #{_pu_loss_forward.1} parent=0 // pred_fallthru
    _
  // Predicated region
  $region6: #{_pu_loss_forward.1} parent=0 // pred_check
    _
  $region7: #{_pu_loss_forward.1} parent=0 // pred_check_branch
    %20 = sbr.rel (0) target = $region9
  $region8: #{_pu_loss_forward.1} parent=0 // pred_region
    %s21 = sadd.s32 0, 0
    %p22 = scmp.lt.s32.totalorder %s21, 0
    %s23 = scalar_select %p22, %s21, 0
    %p24 = scmp.lt.s32.totalorder %s23, 0
    %s25 = scalar_select %p24, %s23, 0
    %s26 = smul.addr %s25, 8
    %s27 = scalar_lea.vmem %s1, %s26
    %s28 = sadd.s32 0, 0
    %p29 = scmp.lt.s32.totalorder %s28, 0
    %s30 = scalar_select %p29, %s28, 0
  $region9: #{_pu_loss_forward.1} parent=0 // pred_fallthru
    _
  %s31 = sadd.s32 0, 0
  %p32 = scmp.lt.s32.totalorder %s31, 0
  %s33 = scalar_select %p32, %s31, 0
  %p34 = scmp.lt.s32.totalorder %s33, 0
  %s35 = scalar_select %p34, %s33, 0
  %s36 = smul.addr %s35, 8
  %s37 = scalar_lea.vmem %s0, %s36
  %s38 = sadd.s32 0, 0
  %p39 = scmp.lt.s32.totalorder %s38, 0
  %s40 = scalar_select %p39, %s38, 0
  %p41 = scmp.lt.s32.totalorder %s40, 0
  %s42 = scalar_select %p41, %s40, 0
  %s43 = smul.addr %s42, 8
  %s44 = scalar_lea.vmem %s1, %s43
  %s45 = sadd.s32 0, 0
  %p46 = scmp.lt.s32.totalorder %s45, 0
  %s47 = scalar_select %p46, %s45, 0
  %p48 = scmp.lt.s32.totalorder %s47, 0
  %s49 = scalar_select %p48, %s47, 0
  %s50 = smul.addr %s49, 8
  %s51 = scalar_lea.vmem %s0, %s50
  %s52 = sadd.s32 0, 0
  %p53 = scmp.lt.s32.totalorder %s52, 0
  %s54 = scalar_select %p53, %s52, 0
  %s55 = sadd.s32 0, 0
  %p56 = scmp.lt.s32.totalorder %s55, 0
  %s57 = scalar_select %p56, %s55, 0
  %p58 = scmp.lt.s32.totalorder %s57, 0
  %s59 = scalar_select %p58, %s57, 0
  %s60 = smul.addr %s59, 8
  %s61 = scalar_lea.vmem %s1, %s60
  %s62 = sadd.s32 0, 0
  %p63 = scmp.lt.s32.totalorder %s62, 0
  %s64 = scalar_select %p63, %s62, 0
  %p65 = scmp.eq.s32.totalorder 0, 0
  // Predicated region
  $region10: #{_pu_loss_forward.1} parent=0 // pred_check
    %p66 = pneg %p65
  $region11: #{_pu_loss_forward.1} parent=0 // pred_check_branch
    %68 = sbr.rel (%p66) target = $region13
  $region12: #{_pu_loss_forward.1} parent=0 // pred_region
    %69 = vst [vmem:[%s2] sm:$0xff] 0.0
    %70 = vst [vmem:[%s2 + $0x8] sm:$0xff] 0.0
    %71 = vst [vmem:[%s2 + $0x10] sm:$0xff] 0.0
    %72 = vst [vmem:[%s2 + $0x18] sm:$0xff] 0.0
  $region13: #{_pu_loss_forward.1} parent=0 // pred_fallthru
    _
  %v73 = vld [vmem:[%s51] sm:$0xff]
  %v74 = vld [vmem:[%s61] sm:$0xff]
  %s75 = sadd.s32 0, 0
  %v76 = vlaneseq
  %v77 = vshrl.u32 %v76, 7
  %v78 = vlaneseq
  %v79 = vand.u32 %v78, 127
  %v80 = vmul.u32 %v77, 128
  %v81 = vadd.s32 %v80, %v79
  %s82 = smul.u32 %s75, 1024
  %s83 = ssub.s32 128, %s82
  %v84 = vstv %s83
  %vm85 = vcmp.lt.s32.totalorder %v81, %v84
  %v86 = vsub.f32 0.0, %v73
  %v87 = vxor.u32 %v86, 2147483648
  %v88 = vmul.f32 %v87, 1.442695
  %v89 = vpow.pop %v88
  %v90 = vadd.f32 %v89, 1.0
  %v91 = vrcp.pop %v90
  %v92 = vmul.f32 %v90, %v91
  %v93 = vsub.f32 1.0, %v92
  %v94 = vmul.f32 %v91, %v93
  %v95 = vadd.f32 %v91, %v94
  %vm96 = vweird.f32 %v90
  %vm97 = vweird.f32 %v91
  %vm98 = vmor %vm96, %vm97
  %v99 = vsel %vm98, %v91, %v95
  %v100 = vand.u32 2147483647, %v90
  %vm101 = vcmp.eq.f32.partialorder %v100, 8.507059e+37
  %v102 = vand.u32 %v90, 2147483648
  %v103 = vor.u32 1.1754944e-38, %v102
  %v104 = vsel %vm101, %v103, %v99
  %v105 = vmul.f32 1.0, %v104
  %vm106 = vcmp.eq.f32.partialorder %v74, 1.0
  %vm107 = vmand %vm85, %vm106
  %vm108 = vcmp.eq.f32.partialorder %v74, -1.0
  %vm109 = vmand %vm85, %vm108
  %v110 = vsel %vm107, 1, 0
  %v111 = vcvt.s32.f32 %v110
  %v112 = vsel %vm109, 1, 0
  %v113 = vcvt.s32.f32 %v112
  %v114 = vsel %vm107, %v105, 0.0
  %v115 = vsel %vm109, %v105, 0.0
  %v116 = vld [vmem:[%s2] sm:$0xff]
  %v117 = vadd.f32 %v111, 0.0
  %v118 = vadd.f32 %v116, %v117
  %119 = vst [vmem:[%s2] sm:$0xff] %v118
  %s120 = scalar_lea.vmem %s2, 8
  %v121 = vld [vmem:[%s120] sm:$0xff]
  %v122 = vadd.f32 %v113, 0.0
  %v123 = vadd.f32 %v121, %v122
  %124 = vst [vmem:[%s120] sm:$0xff] %v123
  %s125 = scalar_lea.vmem %s2, 16
  %v126 = vld [vmem:[%s125] sm:$0xff]
  %v127 = vadd.f32 %v114, 0.0
  %v128 = vadd.f32 %v126, %v127
  %129 = vst [vmem:[%s125] sm:$0xff] %v128
  %s130 = scalar_lea.vmem %s2, 24
  %v131 = vld [vmem:[%s130] sm:$0xff]
  %v132 = vadd.f32 %v115, 0.0
  %v133 = vadd.f32 %v131, %v132
  %134 = vst [vmem:[%s130] sm:$0xff] %v133
  // Predicated region
  $region14: #{_pu_loss_forward.1} parent=0 // pred_check
    _
  $region15: #{_pu_loss_forward.1} parent=0 // pred_check_branch
    %136 = sbr.rel (0) target = $region17
  $region16: #{_pu_loss_forward.1} parent=0 // pred_region
    _
  $region17: #{_pu_loss_forward.1} parent=0 // pred_fallthru
    _
  // Predicated region
  $region18: #{_pu_loss_forward.1} parent=0 // pred_check
    _
  $region19: #{_pu_loss_forward.1} parent=0 // pred_check_branch
    %138 = sbr.rel (0) target = $region21
  $region20: #{_pu_loss_forward.1} parent=0 // pred_region
    _
  $region21: #{_pu_loss_forward.1} parent=0 // pred_fallthru
    _

</llo_original>
